<compile_context>
chip_gen: v7x
topology: tpu7x:2x2x1
jax: 0.10.0
libtpu: 0.0.40
codegen_flags: <defaults>
</compile_context>

<pallas_src>
import functools

import jax
import jax.numpy as jnp
from jax.experimental import pallas as pl
from jax.experimental.pallas import tpu as pltpu

LANE = 128  # vreg lane width


# --------------------------------------------------------------------------
# Fused Pallas kernel: all GCN layers + MLP head in one invocation.
#   a_ref : [Np, Np]     f32   normalized adjacency (padded)
#   x_ref : [Np, F]      bf16  node features (padded, F = 128-lane width)
#   w_ref : [L+2, F, F]  bf16  conv weights (0..L-1), mlp.w1 (L), mlp.w2 (L+1)
#   b_ref : [L+2, 1, F]  f32   matching biases
#   o_ref : [Np, F]      bf16  output block (caller slices to [N, out_ch])
# --------------------------------------------------------------------------
def _fused_gnn_kernel(a_ref, x_ref, w_ref, b_ref, o_ref, *, num_conv_layers):
    a = a_ref[...]                       # f32, resident in VMEM for all layers
    h = x_ref[...]                       # bf16
    for i in range(num_conv_layers):
        # X @ W : bf16 in, f32 accumulate (MXU)
        xw = jnp.dot(h, w_ref[i], preferred_element_type=jnp.float32)
        # A_hat @ (X W) + b : f32 aggregation + f32 bias epilogue
        agg = jnp.dot(a, xw, preferred_element_type=jnp.float32) + b_ref[i]
        if i < num_conv_layers - 1:
            agg = jnp.maximum(agg, 0.0)  # ReLU between conv layers
        # F.dropout(training=False) == identity
        h = agg.astype(jnp.bfloat16)     # bf16 only at the next MXU boundary
    # MLP head: Linear -> ReLU -> Dropout(identity) -> Linear
    h1 = jnp.dot(h, w_ref[num_conv_layers],
                 preferred_element_type=jnp.float32) + b_ref[num_conv_layers]
    h1 = jnp.maximum(h1, 0.0)
    out = jnp.dot(h1.astype(jnp.bfloat16), w_ref[num_conv_layers + 1],
                  preferred_element_type=jnp.float32) + b_ref[num_conv_layers + 1]
    o_ref[...] = out.astype(o_ref.dtype)  # lane-dense [Np, 128] bf16 store


# --------------------------------------------------------------------------
# One-time preparation (NOT in the hot path): pad / cast / stack into slabs.
# --------------------------------------------------------------------------
def _round_up(x, m):
    return ((x + m - 1) // m) * m


def _pad2d(x, rows, cols):
    return jnp.pad(x, ((0, rows - x.shape[0]), (0, cols - x.shape[1])))


def prepare_inputs(params, x, a_hat):
    """Build the 4 kernel operands once; cache them alongside a_hat.

    Zero-filled padding of W/b columns and A rows/cols keeps the math exact
    (padded nodes never contaminate real rows).  If node features change per
    call, only the x pad+cast (one cheap op) needs to move into the hot path.
    """
    n, f_in = x.shape
    hid = params["convs"][0]["w"].shape[1]
    out_ch = params["mlp"]["w2"].shape[1]
    n_pad = _round_up(max(n, 16), 16)                 # bf16 sublane packing
    f = _round_up(max(f_in, hid, out_ch), LANE)       # one lane-dense width

    m = params["mlp"]
    a_p = _pad2d(a_hat.astype(jnp.float32), n_pad, n_pad)          # f32
    x_p = _pad2d(x, n_pad, f).astype(jnp.bfloat16)                 # bf16
    w_list = [_pad2d(c["w"], f, f) for c in params["convs"]] + \
             [_pad2d(m["w1"], f, f), _pad2d(m["w2"], f, f)]
    w_slab = jnp.stack(w_list).astype(jnp.bfloat16)                # [L+2, F, F]
    b_list = [c["b"] for c in params["convs"]] + [m["b1"], m["b2"]]
    b_slab = jnp.stack([jnp.pad(b, (0, f - b.shape[0]))[None, :]
                        for b in b_list]).astype(jnp.float32)      # [L+2, 1, F]

    return {
        "a": a_p, "x": x_p, "w": w_slab, "b": b_slab,
        "num_conv_layers": len(params["convs"]),
        "n": n, "out_ch": out_ch, "n_pad": n_pad, "f": f,
    }


# --------------------------------------------------------------------------
# Jitted hot path: exactly one pallas_call, gridless, whole arrays in VMEM.
# --------------------------------------------------------------------------
@functools.partial(jax.jit, static_argnames=("num_conv_layers",))
def gnn_forward(a_p, x_p, w_slab, b_slab, *, num_conv_layers):
    n_pad, f = x_p.shape
    kern = functools.partial(_fused_gnn_kernel, num_conv_layers=num_conv_layers)
    vmem = pltpu.MemorySpace.VMEM
    return pl.pallas_call(
        kern,
        out_shape=jax.ShapeDtypeStruct((n_pad, f), jnp.bfloat16),
        in_specs=[pl.BlockSpec(memory_space=vmem)] * 4,
        out_specs=pl.BlockSpec(memory_space=vmem),
    )(a_p, x_p, w_slab, b_slab)


# --------------------------------------------------------------------------
# Plain-JAX glue (one-time, outside the hot path)
# --------------------------------------------------------------------------
def normalized_adjacency(edge_index, num_nodes):
    """D^-1/2 (A + I) D^-1/2 from edge_index [2, E] (GCNConv normalization)."""
    row, col = edge_index[0], edge_index[1]
    a = jnp.zeros((num_nodes, num_nodes), jnp.float32)
    a = a.at[row, col].set(1.0)
    a = jnp.maximum(a, a.T)                        # symmetrize (undirected)
    a = a + jnp.eye(num_nodes, dtype=jnp.float32)  # add self-loops
    deg = jnp.sum(a, axis=1)
    d_inv_sqrt = 1.0 / jnp.sqrt(deg)
    return a * d_inv_sqrt[:, None] * d_inv_sqrt[None, :]


def init_params(key, in_channels, hidden_channels, out_channels, num_layers):
    """Deterministic synthetic parameters matching GNNModel.__init__ shapes."""
    params = {"convs": [], "mlp": {}}
    dims = [(in_channels, hidden_channels)]
    for _ in range(num_layers - 2):
        dims.append((hidden_channels, hidden_channels))
    if num_layers > 1:
        dims.append((hidden_channels, hidden_channels))
    keys = jax.random.split(key, len(dims) + 2)
    for k, (cin, cout) in zip(keys[: len(dims)], dims):
        kw, kb = jax.random.split(k)
        params["convs"].append(
            {
                "w": 0.1 * jax.random.normal(kw, (cin, cout), jnp.float32),
                "b": 0.1 * jax.random.normal(kb, (cout,), jnp.float32),
            }
        )
    k1, k2 = keys[-2], keys[-1]
    k1w, k1b = jax.random.split(k1)
    k2w, k2b = jax.random.split(k2)
    params["mlp"] = {
        "w1": 0.1 * jax.random.normal(k1w, (hidden_channels, hidden_channels), jnp.float32),
        "b1": 0.1 * jax.random.normal(k1b, (hidden_channels,), jnp.float32),
        "w2": 0.1 * jax.random.normal(k2w, (hidden_channels, out_channels), jnp.float32),
        "b2": 0.1 * jax.random.normal(k2b, (out_channels,), jnp.float32),
    }
    return params


def gnn_reference(params, x, a_hat):
    """Pure-JAX f32 reference mirroring the fused kernel's semantics."""
    h = x
    num_convs = len(params["convs"])
    for i, c in enumerate(params["convs"]):
        h = a_hat @ (h @ c["w"]) + c["b"][None, :]
        if i < num_convs - 1:
            h = jnp.maximum(h, 0.0)
    m = params["mlp"]
    h = jnp.maximum(h @ m["w1"] + m["b1"][None, :], 0.0)
    return h @ m["w2"] + m["b2"][None, :]


# --------------------------------------------------------------------------
if __name__ == "__main__":
    # small, deterministic problem
    N_NODES = 16
    IN_CH, HID_CH, OUT_CH = 8, 32, 4
    NUM_LAYERS = 3
    N_EDGES = 32

    key = jax.random.PRNGKey(0)
    k_x, k_e, k_p = jax.random.split(key, 3)

    x = jax.random.normal(k_x, (N_NODES, IN_CH), jnp.float32)
    edge_index = jax.random.randint(k_e, (2, N_EDGES), 0, N_NODES, dtype=jnp.int32)
    params = init_params(k_p, IN_CH, HID_CH, OUT_CH, NUM_LAYERS)

    # One-time, outside the hot path: A_hat + padded/casted/stacked operands.
    a_hat = normalized_adjacency(edge_index, N_NODES)
    prep = jax.tree_util.tree_map(
        lambda v: jax.block_until_ready(v) if isinstance(v, jax.Array) else v,
        prepare_inputs(params, x, a_hat))

    # Hot path: one pallas_call.
    out_pad = jax.block_until_ready(
        gnn_forward(prep["a"], prep["x"], prep["w"], prep["b"],
                    num_conv_layers=prep["num_conv_layers"]))

    out = out_pad[: prep["n"], : prep["out_ch"]].astype(jnp.float32)
    assert out.shape == (N_NODES, OUT_CH), out.shape
    assert bool(jnp.all(jnp.isfinite(out)))

    ref = gnn_reference(params, x, a_hat)
    assert bool(jnp.allclose(out, ref, atol=5e-2, rtol=5e-2)), float(
        jnp.max(jnp.abs(out - ref)))
    print("KERNEL_OK")
</pallas_src>

<mosaic_0001>
module attributes {stable_mosaic.version = 11 : i64} {
  func.func @_fused_gnn_kernel(%arg0: memref<16x16xf32, #tpu.memory_space<vmem>>, %arg1: memref<16x128xbf16, #tpu.memory_space<vmem>>, %arg2: memref<5x128x128xbf16, #tpu.memory_space<vmem>>, %arg3: memref<5x1x128xf32, #tpu.memory_space<vmem>>, %arg4: memref<16x128xbf16, #tpu.memory_space<vmem>>) attributes {dimension_semantics = [], scalar_prefetch = 0 : i64, scratch_operands = 0 : i64, tpu.core_type = #tpu.core_type<tc>} {
    %c0 = arith.constant 0 : index
    %c0_0 = arith.constant 0 : index
    %0 = vector.load %arg0[%c0, %c0_0] : memref<16x16xf32, #tpu.memory_space<vmem>>, vector<16x16xf32>
    %c0_1 = arith.constant 0 : index
    %c0_2 = arith.constant 0 : index
    %1 = vector.load %arg1[%c0_1, %c0_2] : memref<16x128xbf16, #tpu.memory_space<vmem>>, vector<16x128xbf16>
    %c0_3 = arith.constant 0 : index
    %c0_4 = arith.constant 0 : index
    %c0_5 = arith.constant 0 : index
    %2 = vector.load %arg2[%c0_3, %c0_4, %c0_5] : memref<5x128x128xbf16, #tpu.memory_space<vmem>>, vector<1x128x128xbf16>
    %3 = vector.shape_cast %2 : vector<1x128x128xbf16> to vector<128x128xbf16>
    %cst = arith.constant dense<0.000000e+00> : vector<16x128xf32>
    %4 = tpu.matmul %1, %3, %cst {dimension_numbers = #tpu.dot_dimension_numbers<[1], [0], [0], [1], [0, 0, 1, 1], [], []>} : vector<16x128xbf16>, vector<128x128xbf16>, vector<16x128xf32> -> vector<16x128xf32>
    %cst_6 = arith.constant dense<0.000000e+00> : vector<16x128xf32>
    %5 = tpu.matmul %0, %4, %cst_6 {dimension_numbers = #tpu.dot_dimension_numbers<[1], [0], [0], [1], [0, 0, 1, 1], [], []>} : vector<16x16xf32>, vector<16x128xf32>, vector<16x128xf32> -> vector<16x128xf32>
    %c0_7 = arith.constant 0 : index
    %c0_8 = arith.constant 0 : index
    %c0_9 = arith.constant 0 : index
    %6 = vector.load %arg3[%c0_7, %c0_8, %c0_9] : memref<5x1x128xf32, #tpu.memory_space<vmem>>, vector<1x1x128xf32>
    %7 = vector.shape_cast %6 : vector<1x1x128xf32> to vector<1x128xf32>
    %8 = vector.broadcast %7 : vector<1x128xf32> to vector<16x128xf32>
    %9 = arith.addf %5, %8 : vector<16x128xf32>
    %cst_10 = arith.constant 0.000000e+00 : f32
    %10 = vector.broadcast %cst_10 : f32 to vector<16x128xf32>
    %11 = arith.maximumf %9, %10 : vector<16x128xf32>
    %12 = arith.truncf %11 : vector<16x128xf32> to vector<16x128xbf16>
    %c1 = arith.constant 1 : index
    %c0_11 = arith.constant 0 : index
    %c0_12 = arith.constant 0 : index
    %13 = vector.load %arg2[%c1, %c0_11, %c0_12] : memref<5x128x128xbf16, #tpu.memory_space<vmem>>, vector<1x128x128xbf16>
    %14 = vector.shape_cast %13 : vector<1x128x128xbf16> to vector<128x128xbf16>
    %cst_13 = arith.constant dense<0.000000e+00> : vector<16x128xf32>
    %15 = tpu.matmul %12, %14, %cst_13 {dimension_numbers = #tpu.dot_dimension_numbers<[1], [0], [0], [1], [0, 0, 1, 1], [], []>} : vector<16x128xbf16>, vector<128x128xbf16>, vector<16x128xf32> -> vector<16x128xf32>
    %cst_14 = arith.constant dense<0.000000e+00> : vector<16x128xf32>
    %16 = tpu.matmul %0, %15, %cst_14 {dimension_numbers = #tpu.dot_dimension_numbers<[1], [0], [0], [1], [0, 0, 1, 1], [], []>} : vector<16x16xf32>, vector<16x128xf32>, vector<16x128xf32> -> vector<16x128xf32>
    %c1_15 = arith.constant 1 : index
    %c0_16 = arith.constant 0 : index
    %c0_17 = arith.constant 0 : index
    %17 = vector.load %arg3[%c1_15, %c0_16, %c0_17] : memref<5x1x128xf32, #tpu.memory_space<vmem>>, vector<1x1x128xf32>
    %18 = vector.shape_cast %17 : vector<1x1x128xf32> to vector<1x128xf32>
    %19 = vector.broadcast %18 : vector<1x128xf32> to vector<16x128xf32>
    %20 = arith.addf %16, %19 : vector<16x128xf32>
    %cst_18 = arith.constant 0.000000e+00 : f32
    %21 = vector.broadcast %cst_18 : f32 to vector<16x128xf32>
    %22 = arith.maximumf %20, %21 : vector<16x128xf32>
    %23 = arith.truncf %22 : vector<16x128xf32> to vector<16x128xbf16>
    %c2 = arith.constant 2 : index
    %c0_19 = arith.constant 0 : index
    %c0_20 = arith.constant 0 : index
    %24 = vector.load %arg2[%c2, %c0_19, %c0_20] : memref<5x128x128xbf16, #tpu.memory_space<vmem>>, vector<1x128x128xbf16>
    %25 = vector.shape_cast %24 : vector<1x128x128xbf16> to vector<128x128xbf16>
    %cst_21 = arith.constant dense<0.000000e+00> : vector<16x128xf32>
    %26 = tpu.matmul %23, %25, %cst_21 {dimension_numbers = #tpu.dot_dimension_numbers<[1], [0], [0], [1], [0, 0, 1, 1], [], []>} : vector<16x128xbf16>, vector<128x128xbf16>, vector<16x128xf32> -> vector<16x128xf32>
    %cst_22 = arith.constant dense<0.000000e+00> : vector<16x128xf32>
    %27 = tpu.matmul %0, %26, %cst_22 {dimension_numbers = #tpu.dot_dimension_numbers<[1], [0], [0], [1], [0, 0, 1, 1], [], []>} : vector<16x16xf32>, vector<16x128xf32>, vector<16x128xf32> -> vector<16x128xf32>
    %c2_23 = arith.constant 2 : index
    %c0_24 = arith.constant 0 : index
    %c0_25 = arith.constant 0 : index
    %28 = vector.load %arg3[%c2_23, %c0_24, %c0_25] : memref<5x1x128xf32, #tpu.memory_space<vmem>>, vector<1x1x128xf32>
    %29 = vector.shape_cast %28 : vector<1x1x128xf32> to vector<1x128xf32>
    %30 = vector.broadcast %29 : vector<1x128xf32> to vector<16x128xf32>
    %31 = arith.addf %27, %30 : vector<16x128xf32>
    %32 = arith.truncf %31 : vector<16x128xf32> to vector<16x128xbf16>
    %c3 = arith.constant 3 : index
    %c0_26 = arith.constant 0 : index
    %c0_27 = arith.constant 0 : index
    %33 = vector.load %arg2[%c3, %c0_26, %c0_27] : memref<5x128x128xbf16, #tpu.memory_space<vmem>>, vector<1x128x128xbf16>
    %34 = vector.shape_cast %33 : vector<1x128x128xbf16> to vector<128x128xbf16>
    %cst_28 = arith.constant dense<0.000000e+00> : vector<16x128xf32>
    %35 = tpu.matmul %32, %34, %cst_28 {dimension_numbers = #tpu.dot_dimension_numbers<[1], [0], [0], [1], [0, 0, 1, 1], [], []>} : vector<16x128xbf16>, vector<128x128xbf16>, vector<16x128xf32> -> vector<16x128xf32>
    %c3_29 = arith.constant 3 : index
    %c0_30 = arith.constant 0 : index
    %c0_31 = arith.constant 0 : index
    %36 = vector.load %arg3[%c3_29, %c0_30, %c0_31] : memref<5x1x128xf32, #tpu.memory_space<vmem>>, vector<1x1x128xf32>
    %37 = vector.shape_cast %36 : vector<1x1x128xf32> to vector<1x128xf32>
    %38 = vector.broadcast %37 : vector<1x128xf32> to vector<16x128xf32>
    %39 = arith.addf %35, %38 : vector<16x128xf32>
    %cst_32 = arith.constant 0.000000e+00 : f32
    %40 = vector.broadcast %cst_32 : f32 to vector<16x128xf32>
    %41 = arith.maximumf %39, %40 : vector<16x128xf32>
    %42 = arith.truncf %41 : vector<16x128xf32> to vector<16x128xbf16>
    %c4 = arith.constant 4 : index
    %c0_33 = arith.constant 0 : index
    %c0_34 = arith.constant 0 : index
    %43 = vector.load %arg2[%c4, %c0_33, %c0_34] : memref<5x128x128xbf16, #tpu.memory_space<vmem>>, vector<1x128x128xbf16>
    %44 = vector.shape_cast %43 : vector<1x128x128xbf16> to vector<128x128xbf16>
    %cst_35 = arith.constant dense<0.000000e+00> : vector<16x128xf32>
    %45 = tpu.matmul %42, %44, %cst_35 {dimension_numbers = #tpu.dot_dimension_numbers<[1], [0], [0], [1], [0, 0, 1, 1], [], []>} : vector<16x128xbf16>, vector<128x128xbf16>, vector<16x128xf32> -> vector<16x128xf32>
    %c4_36 = arith.constant 4 : index
    %c0_37 = arith.constant 0 : index
    %c0_38 = arith.constant 0 : index
    %46 = vector.load %arg3[%c4_36, %c0_37, %c0_38] : memref<5x1x128xf32, #tpu.memory_space<vmem>>, vector<1x1x128xf32>
    %47 = vector.shape_cast %46 : vector<1x1x128xf32> to vector<1x128xf32>
    %48 = vector.broadcast %47 : vector<1x128xf32> to vector<16x128xf32>
    %49 = arith.addf %45, %48 : vector<16x128xf32>
    %50 = arith.truncf %49 : vector<16x128xf32> to vector<16x128xbf16>
    %c0_39 = arith.constant 0 : index
    %c0_40 = arith.constant 0 : index
    %51 = vector.load %arg4[%c0_39, %c0_40] : memref<16x128xbf16, #tpu.memory_space<vmem>>, vector<16x128xbf16>
    tpu.vector_store %arg4[%c0_39, %c0_40], %50 {strides = array<i32>} : memref<16x128xbf16, #tpu.memory_space<vmem>>, vector<16x128xbf16>,
    return
  }
}

</mosaic_0001>

<llo_original>
// kernel: gnn_forward.1
$region0: #{gnn_forward.1}
  #allocation0 [shape = 'u32[]', space=smem, size = 0x4, offset = 0x4, fixed_abs, tag = 'smem constant byte address 0x4 - core index']
  #allocation1 [shape = 'u32[144,128]{1,0:T(1,128)}', space=vmem, size = 0x12000, scoped, tag = 'internal scratch']
  %s0 = inlined_call_operand.hbm [shape: f32[16,16], index: 0, kind: input, shape index: {}]
  %s1 = inlined_call_operand.hbm [shape: bf16[16,128], index: 1, kind: input, shape index: {}]
  %s2 = inlined_call_operand.hbm [shape: bf16[5,128,128], index: 2, kind: input, shape index: {}]
  %s3 = inlined_call_operand.vmem [shape: f32[5,1,128], index: 3, kind: input, shape index: {}]
  %s4 = inlined_call_operand.hbm [shape: bf16[16,128], index: 4, kind: output, shape index: {}]
  %s5 = sld [smem:[#allocation0]]
  $region38: #{gnn_forward.1} parent=0
    _
  %s7 = ssub.s32 1, %s5
  %s8 = scalar_select 0, %s7, %s5
  $region1: #{gnn_forward.1} parent=0
    #allocation2 [shape = 'u8[8192]{0}', space=vmem, size = 0x2000, scoped, tag = 'input window, operand 0, single buffered']
    #allocation3 [shape = 's32[1]{0}', space=sflag, size = 0x4, scoped, tag = 'scoped memory for gnn_forward.1']
    #allocation4 [shape = 's32[1]{0}', space=sflag, size = 0x4, scoped, tag = 'scoped memory for gnn_forward.1']
    #allocation5 [shape = 'u8[4096]{0}', space=vmem, size = 0x1000, scoped, tag = 'input window, operand 1, single buffered']
    #allocation6 [shape = 's32[1]{0}', space=sflag, size = 0x4, scoped, tag = 'scoped memory for gnn_forward.1']
    #allocation7 [shape = 'u8[163840]{0}', space=vmem, size = 0x28000, scoped, tag = 'input window, operand 2, single buffered']
    #allocation8 [shape = 'u8[4096]{0}', space=vmem, size = 0x1000, scoped, tag = 'output window, operand 0, single buffered']
    %9 = vsyncpa [#allocation3], 0
    %10 = vsyncpa [#allocation6], 0
    %11 = vsyncpa [#allocation4], 0
    // Predicated region
    $region2: #{gnn_forward.1} parent=1 // pred_check
      _
    $region3: #{gnn_forward.1} parent=1 // pred_check_branch
      %13 = sbr.rel (0) target = $region5
    $region4: #{gnn_forward.1} parent=1 // pred_region
      %s15 = ssub.s32 256, 256
      %16 = vsyncadd [#allocation3], %s15
      %s17 = sshll.u32 [#allocation2], 4
      %s18 = int_to_ptr.vmem [resolvable:$true] %s17
      %23 = dma.hbm_to_vmem [thread:$0]  %s0, 256, %s18, [#allocation3], 128, 128, 8
    $region5: #{gnn_forward.1} parent=1 // pred_fallthru
      _
    // Predicated region
    $region6: #{gnn_forward.1} parent=1 // pred_check
      _
    $region7: #{gnn_forward.1} parent=1 // pred_check_branch
      %25 = sbr.rel (0) target = $region9
    $region8: #{gnn_forward.1} parent=1 // pred_region
      %s27 = ssub.s32 128, 128
      %28 = vsyncadd [#allocation6], %s27
      %s29 = sshll.u32 [#allocation5], 4
      %s30 = int_to_ptr.vmem [resolvable:$true] %s29
      %35 = dma.hbm_to_vmem [thread:$0]  %s1, 128, %s30, [#allocation6], 64, 64, 4
    $region9: #{gnn_forward.1} parent=1 // pred_fallthru
      _
    // Predicated region
    $region10: #{gnn_forward.1} parent=1 // pred_check
      _
    $region11: #{gnn_forward.1} parent=1 // pred_check_branch
      %37 = sbr.rel (0) target = $region13
    $region12: #{gnn_forward.1} parent=1 // pred_region
      %s39 = ssub.s32 5120, 5120
      %40 = vsyncadd [#allocation6], %s39
      %s41 = sshll.u32 [#allocation7], 4
      %s42 = int_to_ptr.vmem [resolvable:$true] %s41
      %47 = dma.hbm_to_vmem [thread:$0]  %s2, 5120, %s42, [#allocation6], 64, 64, 4
    $region13: #{gnn_forward.1} parent=1 // pred_fallthru
      _
    // Predicated region
    $region14: #{gnn_forward.1} parent=1 // pred_check
      _
    $region15: #{gnn_forward.1} parent=1 // pred_check_branch
      %49 = sbr.rel (0) target = $region17
    $region16: #{gnn_forward.1} parent=1 // pred_region
      _
    $region17: #{gnn_forward.1} parent=1 // pred_fallthru
      _
    // Predicated region
    $region18: #{gnn_forward.1} parent=1 // pred_check
      _
    $region19: #{gnn_forward.1} parent=1 // pred_check_branch
      %51 = sbr.rel (0) target = $region21
    $region20: #{gnn_forward.1} parent=1 // pred_region
      %52 = dma.done [#allocation3], 256
    $region21: #{gnn_forward.1} parent=1 // pred_fallthru
      _
    // Predicated region
    $region22: #{gnn_forward.1} parent=1 // pred_check
      _
    $region23: #{gnn_forward.1} parent=1 // pred_check_branch
      %54 = sbr.rel (0) target = $region25
    $region24: #{gnn_forward.1} parent=1 // pred_region
      %55 = dma.done [#allocation6], 128
    $region25: #{gnn_forward.1} parent=1 // pred_fallthru
      _
    // Predicated region
    $region26: #{gnn_forward.1} parent=1 // pred_check
      _
    $region27: #{gnn_forward.1} parent=1 // pred_check_branch
      %57 = sbr.rel (0) target = $region29
    $region28: #{gnn_forward.1} parent=1 // pred_region
      %58 = dma.done [#allocation6], 5120
    $region29: #{gnn_forward.1} parent=1 // pred_fallthru
      _
    %v60 = vld [vmem:[#allocation2] sm:$0xff]
    %v61 = vld [vmem:[#allocation2 + $0x8] sm:$0xff]
    %v62 = vld [vmem:[#allocation5] sm:$0xf]
    %v63 = vld [vmem:[#allocation5 + $0x4] sm:$0xf]
    %v64 = vld [vmem:[#allocation7] sm:$0xf]
    %v65 = vld [vmem:[#allocation7 + $0x4] sm:$0xf]
    %v66 = vld [vmem:[#allocation7 + $0x8] sm:$0xf]
    %v67 = vld [vmem:[#allocation7 + $0xc] sm:$0xf]
    %v68 = vld [vmem:[#allocation7 + $0x10] sm:$0xf]
    %v69 = vld [vmem:[#allocation7 + $0x14] sm:$0xf]
    %v70 = vld [vmem:[#allocation7 + $0x18] sm:$0xf]
    %v71 = vld [vmem:[#allocation7 + $0x1c] sm:$0xf]
    %v72 = vld [vmem:[#allocation7 + $0x20] sm:$0xf]
    %v73 = vld [vmem:[#allocation7 + $0x24] sm:$0xf]
    %v74 = vld [vmem:[#allocation7 + $0x28] sm:$0xf]
    %v75 = vld [vmem:[#allocation7 + $0x2c] sm:$0xf]
    %v76 = vld [vmem:[#allocation7 + $0x30] sm:$0xf]
    %v77 = vld [vmem:[#allocation7 + $0x34] sm:$0xf]
    %v78 = vld [vmem:[#allocation7 + $0x38] sm:$0xf]
    %v79 = vld [vmem:[#allocation7 + $0x3c] sm:$0xf]
    %v82 = vunpack.c.l.b16 %v62
    %v83 = vunpack.c.l.b16 %v63
    %v84 = vpack.c.b16 %v83, %v82
    %v102 = vunpack.c.l.b16 %v64
    %v103 = vunpack.c.l.b16 %v65
    %v104 = vunpack.c.l.b16 %v66
    %v105 = vunpack.c.l.b16 %v67
    %v106 = vunpack.c.l.b16 %v68
    %v107 = vunpack.c.l.b16 %v69
    %v108 = vunpack.c.l.b16 %v70
    %v109 = vunpack.c.l.b16 %v71
    %v110 = vunpack.c.l.b16 %v72
    %v111 = vunpack.c.l.b16 %v73
    %v112 = vunpack.c.l.b16 %v74
    %v113 = vunpack.c.l.b16 %v75
    %v114 = vunpack.c.l.b16 %v76
    %v115 = vunpack.c.l.b16 %v77
    %v116 = vunpack.c.l.b16 %v78
    %v117 = vunpack.c.l.b16 %v79
    %v118 = vpack.c.b16 %v103, %v102
    %v119 = vpack.c.b16 %v105, %v104
    %v120 = vpack.c.b16 %v107, %v106
    %v121 = vpack.c.b16 %v109, %v108
    %v122 = vpack.c.b16 %v111, %v110
    %v123 = vpack.c.b16 %v113, %v112
    %v124 = vpack.c.b16 %v115, %v114
    %v125 = vpack.c.b16 %v117, %v116
    %134 = vmatprep.subr.bf16.mxu0 0
    %135 = vmatpush1.bf16.msra.mxu0 %v118
    %136 = vmatprep.subr.bf16.mxu0 0
    %137 = vmatpush1.bf16.msra.mxu0 %v119
    %138 = vmatprep.subr.bf16.mxu0 0
    %139 = vmatpush1.bf16.msra.mxu0 %v120
    %140 = vmatprep.subr.bf16.mxu0 0
    %141 = vmatpush1.bf16.msra.mxu0 %v121
    %142 = vmatprep.subr.bf16.mxu0 0
    %143 = vmatpush1.bf16.msra.mxu0 %v122
    %144 = vmatprep.subr.bf16.mxu0 0
    %145 = vmatpush1.bf16.msra.mxu0 %v123
    %146 = vmatprep.subr.bf16.mxu0 0
    %147 = vmatpush1.bf16.msra.mxu0 %v124
    %148 = vmatprep.subr.bf16.mxu0 0
    %149 = vmatpush1.bf16.msra.mxu0 %v125
    %150 = vmatprep.subr.bf16.mxu0 0
    %151 = vmatpush1.bf16.msra.mxu0 0
    %152 = vmatprep.subr.bf16.mxu0 0
    %153 = vmatpush1.bf16.msra.mxu0 0
    %154 = vmatprep.subr.bf16.mxu0 0
    %155 = vmatpush1.bf16.msra.mxu0 0
    %156 = vmatprep.subr.bf16.mxu0 0
    %157 = vmatpush1.bf16.msra.mxu0 0
    %158 = vmatprep.subr.bf16.mxu0 0
    %159 = vmatpush1.bf16.msra.mxu0 0
    %160 = vmatprep.subr.bf16.mxu0 0
    %161 = vmatpush1.bf16.msra.mxu0 0
    %162 = vmatprep.subr.bf16.mxu0 0
    %163 = vmatpush1.bf16.msra.mxu0 0
    %164 = vmatprep.subr.bf16.mxu0 0
    %165 = vmatpush1.bf16.msra.mxu0 0
    %166 = vmatprep.mubr.bf16.mxu0 0
    %167 = vmatmul.mubr.bf16.gmra.mrb[0].mxu0 %v84
    %v168 = vpop.f32.mrb[0].mxu0
    %v169 = vadd.f32 0.0, %v168
    %v170 = vpop.f32.mrb[0].mxu0
    %v171 = vpop.f32.mrb[0].mxu0
    %v172 = vadd.f32 0.0, %v171
    %v173 = vpop.f32.mrb[0].mxu0
    %174 = vdwg.mxu0
    %v175 = vld [vmem:[%s3] sm:$0x1]
    %v177 = vlaneseq
    %v178 = vshrl.u32 %v177, 7
    %v179 = vsub.s32 0, %v178
    %v180 = vrot.slane %v175, %v179
    %vm182 = vcmask 130048
    %v184 = vsel %vm182, %v60, 0
    %v187 = vsel %vm182, %v61, 0
    %189 = vmatprep.subr.mxu0 0.0
    %190 = vmatpush1.msra.mxu0 %v169
    %191 = vmatprep.subr.mxu0 0.0
    %192 = vmatpush1.msra.mxu0 %v172
    %193 = vmatprep.subr.mxu0 0.0
    %194 = vmatpush1.msra.mxu0 0.0
    %195 = vmatprep.subr.mxu0 0.0
    %196 = vmatpush1.msra.mxu0 0.0
    %197 = vmatprep.subr.mxu0 0.0
    %198 = vmatpush1.msra.mxu0 0.0
    %199 = vmatprep.subr.mxu0 0.0
    %200 = vmatpush1.msra.mxu0 0.0
    %201 = vmatprep.subr.mxu0 0.0
    %202 = vmatpush1.msra.mxu0 0.0
    %203 = vmatprep.subr.mxu0 0.0
    %204 = vmatpush1.msra.mxu0 0.0
    %205 = vmatprep.subr.mxu0 0.0
    %206 = vmatpush1.msra.mxu0 0.0
    %207 = vmatprep.subr.mxu0 0.0
    %208 = vmatpush1.msra.mxu0 0.0
    %209 = vmatprep.subr.mxu0 0.0
    %210 = vmatpush1.msra.mxu0 0.0
    %211 = vmatprep.subr.mxu0 0.0
    %212 = vmatpush1.msra.mxu0 0.0
    %213 = vmatprep.subr.mxu0 0.0
    %214 = vmatpush1.msra.mxu0 0.0
    %215 = vmatprep.subr.mxu0 0.0
    %216 = vmatpush1.msra.mxu0 0.0
    %217 = vmatprep.subr.mxu0 0.0
    %218 = vmatpush1.msra.mxu0 0.0
    %219 = vmatprep.subr.mxu0 0.0
    %220 = vmatpush1.msra.mxu0 0.0
    %221 = vmatprep.subr.mxu0 0.0
    %222 = vmatpush1.msra.mxu0 0.0
    %223 = vmatprep.subr.mxu0 0.0
    %224 = vmatpush1.msra.mxu0 0.0
    %225 = vmatprep.subr.mxu0 0.0
    %226 = vmatpush1.msra.mxu0 0.0
    %227 = vmatprep.subr.mxu0 0.0
    %228 = vmatpush1.msra.mxu0 0.0
    %229 = vmatprep.subr.mxu0 0.0
    %230 = vmatpush1.msra.mxu0 0.0
    %231 = vmatprep.subr.mxu0 0.0
    %232 = vmatpush1.msra.mxu0 0.0
    %233 = vmatprep.subr.mxu0 0.0
    %234 = vmatpush1.msra.mxu0 0.0
    %235 = vmatprep.subr.mxu0 0.0
    %236 = vmatpush1.msra.mxu0 0.0
    %237 = vmatprep.subr.mxu0 0.0
    %238 = vmatpush1.msra.mxu0 0.0
    %239 = vmatprep.subr.mxu0 0.0
    %240 = vmatpush1.msra.mxu0 0.0
    %241 = vmatprep.subr.mxu0 0.0
    %242 = vmatpush1.msra.mxu0 0.0
    %243 = vmatprep.subr.mxu0 0.0
    %244 = vmatpush1.msra.mxu0 0.0
    %245 = vmatprep.subr.mxu0 0.0
    %246 = vmatpush1.msra.mxu0 0.0
    %247 = vmatprep.subr.mxu0 0.0
    %248 = vmatpush1.msra.mxu0 0.0
    %249 = vmatprep.subr.mxu0 0.0
    %250 = vmatpush1.msra.mxu0 0.0
    %251 = vmatprep.subr.mxu0 0.0
    %252 = vmatpush1.msra.mxu0 0.0
    %253 = vmatprep.mubr.f32.mxu0 0.0
    %254 = vmatmul.mubr.f32.gmra.mrb[0].mxu0 %v184
    %v255 = vpop.f32.mrb[0].mxu0
    %v256 = vadd.f32 %v180, %v255
    %v257 = vpop.f32.mrb[0].mxu0
    %258 = vmatprep.mubr.f32.mxu0 0.0
    %259 = vmatmul.mubr.f32.gmra.mrb[0].mxu0 %v187
    %v260 = vpop.f32.mrb[0].mxu0
    %v261 = vadd.f32 %v180, %v260
    %v262 = vpop.f32.mrb[0].mxu0
    %263 = vdwg.mxu0
    %v264 = vmax.f32 %v256, 0.0
    %v265 = vmax.f32 %v261, 0.0
    %v266 = vpack.c.bf16 %v265, %v264
    %s267 = scalar_lea.vmem [#allocation7], 64
    %v268 = vld [vmem:[%s267] sm:$0xf]
    %v269 = vld [vmem:[%s267 + $0x4] sm:$0xf]
    %v270 = vld [vmem:[%s267 + $0x8] sm:$0xf]
    %v271 = vld [vmem:[%s267 + $0xc] sm:$0xf]
    %v272 = vld [vmem:[%s267 + $0x10] sm:$0xf]
    %v273 = vld [vmem:[%s267 + $0x14] sm:$0xf]
    %v274 = vld [vmem:[%s267 + $0x18] sm:$0xf]
    %v275 = vld [vmem:[%s267 + $0x1c] sm:$0xf]
    %v276 = vld [vmem:[%s267 + $0x20] sm:$0xf]
    %v277 = vld [vmem:[%s267 + $0x24] sm:$0xf]
    %v278 = vld [vmem:[%s267 + $0x28] sm:$0xf]
    %v279 = vld [vmem:[%s267 + $0x2c] sm:$0xf]
    %v280 = vld [vmem:[%s267 + $0x30] sm:$0xf]
    %v281 = vld [vmem:[%s267 + $0x34] sm:$0xf]
    %v282 = vld [vmem:[%s267 + $0x38] sm:$0xf]
    %v283 = vld [vmem:[%s267 + $0x3c] sm:$0xf]
    %v300 = vunpack.c.l.b16 %v268
    %v301 = vunpack.c.l.b16 %v269
    %v302 = vunpack.c.l.b16 %v270
    %v303 = vunpack.c.l.b16 %v271
    %v304 = vunpack.c.l.b16 %v272
    %v305 = vunpack.c.l.b16 %v273
    %v306 = vunpack.c.l.b16 %v274
    %v307 = vunpack.c.l.b16 %v275
    %v308 = vunpack.c.l.b16 %v276
    %v309 = vunpack.c.l.b16 %v277
    %v310 = vunpack.c.l.b16 %v278
    %v311 = vunpack.c.l.b16 %v279
    %v312 = vunpack.c.l.b16 %v280
    %v313 = vunpack.c.l.b16 %v281
    %v314 = vunpack.c.l.b16 %v282
    %v315 = vunpack.c.l.b16 %v283
    %v316 = vpack.c.b16 %v301, %v300
    %v317 = vpack.c.b16 %v303, %v302
    %v318 = vpack.c.b16 %v305, %v304
    %v319 = vpack.c.b16 %v307, %v306
    %v320 = vpack.c.b16 %v309, %v308
    %v321 = vpack.c.b16 %v311, %v310
    %v322 = vpack.c.b16 %v313, %v312
    %v323 = vpack.c.b16 %v315, %v314
    %332 = vmatprep.subr.bf16.mxu0 0
    %333 = vmatpush1.bf16.msra.mxu0 %v316
    %334 = vmatprep.subr.bf16.mxu0 0
    %335 = vmatpush1.bf16.msra.mxu0 %v317
    %336 = vmatprep.subr.bf16.mxu0 0
    %337 = vmatpush1.bf16.msra.mxu0 %v318
    %338 = vmatprep.subr.bf16.mxu0 0
    %339 = vmatpush1.bf16.msra.mxu0 %v319
    %340 = vmatprep.subr.bf16.mxu0 0
    %341 = vmatpush1.bf16.msra.mxu0 %v320
    %342 = vmatprep.subr.bf16.mxu0 0
    %343 = vmatpush1.bf16.msra.mxu0 %v321
    %344 = vmatprep.subr.bf16.mxu0 0
    %345 = vmatpush1.bf16.msra.mxu0 %v322
    %346 = vmatprep.subr.bf16.mxu0 0
    %347 = vmatpush1.bf16.msra.mxu0 %v323
    %348 = vmatprep.subr.bf16.mxu0 0
    %349 = vmatpush1.bf16.msra.mxu0 0
    %350 = vmatprep.subr.bf16.mxu0 0
    %351 = vmatpush1.bf16.msra.mxu0 0
    %352 = vmatprep.subr.bf16.mxu0 0
    %353 = vmatpush1.bf16.msra.mxu0 0
    %354 = vmatprep.subr.bf16.mxu0 0
    %355 = vmatpush1.bf16.msra.mxu0 0
    %356 = vmatprep.subr.bf16.mxu0 0
    %357 = vmatpush1.bf16.msra.mxu0 0
    %358 = vmatprep.subr.bf16.mxu0 0
    %359 = vmatpush1.bf16.msra.mxu0 0
    %360 = vmatprep.subr.bf16.mxu0 0
    %361 = vmatpush1.bf16.msra.mxu0 0
    %362 = vmatprep.subr.bf16.mxu0 0
    %363 = vmatpush1.bf16.msra.mxu0 0
    %364 = vmatprep.mubr.bf16.mxu0 0
    %365 = vmatmul.mubr.bf16.gmra.mrb[0].mxu0 %v266
    %v366 = vpop.f32.mrb[0].mxu0
    %v367 = vadd.f32 0.0, %v366
    %v368 = vpop.f32.mrb[0].mxu0
    %v369 = vpop.f32.mrb[0].mxu0
    %v370 = vadd.f32 0.0, %v369
    %v371 = vpop.f32.mrb[0].mxu0
    %372 = vdwg.mxu0
    %s373 = scalar_lea.vmem %s3, 1
    %v374 = vld [vmem:[%s373] sm:$0x1]
    %v376 = vlaneseq
    %v377 = vshrl.u32 %v376, 7
    %v378 = vsub.s32 0, %v377
    %v379 = vrot.slane %v374, %v378
    %381 = vmatprep.subr.mxu0 0.0
    %382 = vmatpush1.msra.mxu0 %v367
    %383 = vmatprep.subr.mxu0 0.0
    %384 = vmatpush1.msra.mxu0 %v370
    %385 = vmatprep.subr.mxu0 0.0
    %386 = vmatpush1.msra.mxu0 0.0
    %387 = vmatprep.subr.mxu0 0.0
    %388 = vmatpush1.msra.mxu0 0.0
    %389 = vmatprep.subr.mxu0 0.0
    %390 = vmatpush1.msra.mxu0 0.0
    %391 = vmatprep.subr.mxu0 0.0
    %392 = vmatpush1.msra.mxu0 0.0
    %393 = vmatprep.subr.mxu0 0.0
    %394 = vmatpush1.msra.mxu0 0.0
    %395 = vmatprep.subr.mxu0 0.0
    %396 = vmatpush1.msra.mxu0 0.0
    %397 = vmatprep.subr.mxu0 0.0
    %398 = vmatpush1.msra.mxu0 0.0
    %399 = vmatprep.subr.mxu0 0.0
    %400 = vmatpush1.msra.mxu0 0.0
    %401 = vmatprep.subr.mxu0 0.0
    %402 = vmatpush1.msra.mxu0 0.0
    %403 = vmatprep.subr.mxu0 0.0
    %404 = vmatpush1.msra.mxu0 0.0
    %405 = vmatprep.subr.mxu0 0.0
    %406 = vmatpush1.msra.mxu0 0.0
    %407 = vmatprep.subr.mxu0 0.0
    %408 = vmatpush1.msra.mxu0 0.0
    %409 = vmatprep.subr.mxu0 0.0
    %410 = vmatpush1.msra.mxu0 0.0
    %411 = vmatprep.subr.mxu0 0.0
    %412 = vmatpush1.msra.mxu0 0.0
    %413 = vmatprep.subr.mxu0 0.0
    %414 = vmatpush1.msra.mxu0 0.0
    %415 = vmatprep.subr.mxu0 0.0
    %416 = vmatpush1.msra.mxu0 0.0
    %417 = vmatprep.subr.mxu0 0.0
    %418 = vmatpush1.msra.mxu0 0.0
    %419 = vmatprep.subr.mxu0 0.0
    %420 = vmatpush1.msra.mxu0 0.0
    %421 = vmatprep.subr.mxu0 0.0
    %422 = vmatpush1.msra.mxu0 0.0
    %423 = vmatprep.subr.mxu0 0.0
    %424 = vmatpush1.msra.mxu0 0.0
    %425 = vmatprep.subr.mxu0 0.0
    %426 = vmatpush1.msra.mxu0 0.0
    %427 = vmatprep.subr.mxu0 0.0
    %428 = vmatpush1.msra.mxu0 0.0
    %429 = vmatprep.subr.mxu0 0.0
    %430 = vmatpush1.msra.mxu0 0.0
    %431 = vmatprep.subr.mxu0 0.0
    %432 = vmatpush1.msra.mxu0 0.0
    %433 = vmatprep.subr.mxu0 0.0
    %434 = vmatpush1.msra.mxu0 0.0
    %435 = vmatprep.subr.mxu0 0.0
    %436 = vmatpush1.msra.mxu0 0.0
    %437 = vmatprep.subr.mxu0 0.0
    %438 = vmatpush1.msra.mxu0 0.0
    %439 = vmatprep.subr.mxu0 0.0
    %440 = vmatpush1.msra.mxu0 0.0
    %441 = vmatprep.subr.mxu0 0.0
    %442 = vmatpush1.msra.mxu0 0.0
    %443 = vmatprep.subr.mxu0 0.0
    %444 = vmatpush1.msra.mxu0 0.0
    %445 = vmatprep.mubr.f32.mxu0 0.0
    %446 = vmatmul.mubr.f32.gmra.mrb[0].mxu0 %v184
    %v447 = vpop.f32.mrb[0].mxu0
    %v448 = vadd.f32 %v379, %v447
    %v449 = vpop.f32.mrb[0].mxu0
    %450 = vmatprep.mubr.f32.mxu0 0.0
    %451 = vmatmul.mubr.f32.gmra.mrb[0].mxu0 %v187
    %v452 = vpop.f32.mrb[0].mxu0
    %v453 = vadd.f32 %v379, %v452
    %v454 = vpop.f32.mrb[0].mxu0
    %455 = vdwg.mxu0
    %v456 = vmax.f32 %v448, 0.0
    %v457 = vmax.f32 %v453, 0.0
    %v458 = vpack.c.bf16 %v457, %v456
    %s459 = scalar_lea.vmem [#allocation7], 128
    %v460 = vld [vmem:[%s459] sm:$0xf]
    %v461 = vld [vmem:[%s459 + $0x4] sm:$0xf]
    %v462 = vld [vmem:[%s459 + $0x8] sm:$0xf]
    %v463 = vld [vmem:[%s459 + $0xc] sm:$0xf]
    %v464 = vld [vmem:[%s459 + $0x10] sm:$0xf]
    %v465 = vld [vmem:[%s459 + $0x14] sm:$0xf]
    %v466 = vld [vmem:[%s459 + $0x18] sm:$0xf]
    %v467 = vld [vmem:[%s459 + $0x1c] sm:$0xf]
    %v468 = vld [vmem:[%s459 + $0x20] sm:$0xf]
    %v469 = vld [vmem:[%s459 + $0x24] sm:$0xf]
    %v470 = vld [vmem:[%s459 + $0x28] sm:$0xf]
    %v471 = vld [vmem:[%s459 + $0x2c] sm:$0xf]
    %v472 = vld [vmem:[%s459 + $0x30] sm:$0xf]
    %v473 = vld [vmem:[%s459 + $0x34] sm:$0xf]
    %v474 = vld [vmem:[%s459 + $0x38] sm:$0xf]
    %v475 = vld [vmem:[%s459 + $0x3c] sm:$0xf]
    %v492 = vunpack.c.l.b16 %v460
    %v493 = vunpack.c.l.b16 %v461
    %v494 = vunpack.c.l.b16 %v462
    %v495 = vunpack.c.l.b16 %v463
    %v496 = vunpack.c.l.b16 %v464
    %v497 = vunpack.c.l.b16 %v465
    %v498 = vunpack.c.l.b16 %v466
    %v499 = vunpack.c.l.b16 %v467
    %v500 = vunpack.c.l.b16 %v468
    %v501 = vunpack.c.l.b16 %v469
    %v502 = vunpack.c.l.b16 %v470
    %v503 = vunpack.c.l.b16 %v471
    %v504 = vunpack.c.l.b16 %v472
    %v505 = vunpack.c.l.b16 %v473
    %v506 = vunpack.c.l.b16 %v474
    %v507 = vunpack.c.l.b16 %v475
    %v508 = vpack.c.b16 %v493, %v492
    %v509 = vpack.c.b16 %v495, %v494
    %v510 = vpack.c.b16 %v497, %v496
    %v511 = vpack.c.b16 %v499, %v498
    %v512 = vpack.c.b16 %v501, %v500
    %v513 = vpack.c.b16 %v503, %v502
    %v514 = vpack.c.b16 %v505, %v504
    %v515 = vpack.c.b16 %v507, %v506
    %524 = vmatprep.subr.bf16.mxu0 0
    %525 = vmatpush1.bf16.msra.mxu0 %v508
    %526 = vmatprep.subr.bf16.mxu0 0
    %527 = vmatpush1.bf16.msra.mxu0 %v509
    %528 = vmatprep.subr.bf16.mxu0 0
    %529 = vmatpush1.bf16.msra.mxu0 %v510
    %530 = vmatprep.subr.bf16.mxu0 0
    %531 = vmatpush1.bf16.msra.mxu0 %v511
    %532 = vmatprep.subr.bf16.mxu0 0
    %533 = vmatpush1.bf16.msra.mxu0 %v512
    %534 = vmatprep.subr.bf16.mxu0 0
    %535 = vmatpush1.bf16.msra.mxu0 %v513
    %536 = vmatprep.subr.bf16.mxu0 0
    %537 = vmatpush1.bf16.msra.mxu0 %v514
    %538 = vmatprep.subr.bf16.mxu0 0
    %539 = vmatpush1.bf16.msra.mxu0 %v515
    %540 = vmatprep.subr.bf16.mxu0 0
    %541 = vmatpush1.bf16.msra.mxu0 0
    %542 = vmatprep.subr.bf16.mxu0 0
    %543 = vmatpush1.bf16.msra.mxu0 0
    %544 = vmatprep.subr.bf16.mxu0 0
    %545 = vmatpush1.bf16.msra.mxu0 0
    %546 = vmatprep.subr.bf16.mxu0 0
    %547 = vmatpush1.bf16.msra.mxu0 0
    %548 = vmatprep.subr.bf16.mxu0 0
    %549 = vmatpush1.bf16.msra.mxu0 0
    %550 = vmatprep.subr.bf16.mxu0 0
    %551 = vmatpush1.bf16.msra.mxu0 0
    %552 = vmatprep.subr.bf16.mxu0 0
    %553 = vmatpush1.bf16.msra.mxu0 0
    %554 = vmatprep.subr.bf16.mxu0 0
    %555 = vmatpush1.bf16.msra.mxu0 0
    %556 = vmatprep.mubr.bf16.mxu0 0
    %557 = vmatmul.mubr.bf16.gmra.mrb[0].mxu0 %v458
    %v558 = vpop.f32.mrb[0].mxu0
    %v559 = vadd.f32 0.0, %v558
    %v560 = vpop.f32.mrb[0].mxu0
    %v561 = vpop.f32.mrb[0].mxu0
    %v562 = vadd.f32 0.0, %v561
    %v563 = vpop.f32.mrb[0].mxu0
    %564 = vdwg.mxu0
    %s565 = scalar_lea.vmem %s3, 2
    %v566 = vld [vmem:[%s565] sm:$0x1]
    %v568 = vlaneseq
    %v569 = vshrl.u32 %v568, 7
    %v570 = vsub.s32 0, %v569
    %v571 = vrot.slane %v566, %v570
    %573 = vmatprep.subr.mxu0 0.0
    %574 = vmatpush1.msra.mxu0 %v559
    %575 = vmatprep.subr.mxu0 0.0
    %576 = vmatpush1.msra.mxu0 %v562
    %577 = vmatprep.subr.mxu0 0.0
    %578 = vmatpush1.msra.mxu0 0.0
    %579 = vmatprep.subr.mxu0 0.0
    %580 = vmatpush1.msra.mxu0 0.0
    %581 = vmatprep.subr.mxu0 0.0
    %582 = vmatpush1.msra.mxu0 0.0
    %583 = vmatprep.subr.mxu0 0.0
    %584 = vmatpush1.msra.mxu0 0.0
    %585 = vmatprep.subr.mxu0 0.0
    %586 = vmatpush1.msra.mxu0 0.0
    %587 = vmatprep.subr.mxu0 0.0
    %588 = vmatpush1.msra.mxu0 0.0
    %589 = vmatprep.subr.mxu0 0.0
    %590 = vmatpush1.msra.mxu0 0.0
    %591 = vmatprep.subr.mxu0 0.0
    %592 = vmatpush1.msra.mxu0 0.0
    %593 = vmatprep.subr.mxu0 0.0
    %594 = vmatpush1.msra.mxu0 0.0
    %595 = vmatprep.subr.mxu0 0.0
    %596 = vmatpush1.msra.mxu0 0.0
    %597 = vmatprep.subr.mxu0 0.0
    %598 = vmatpush1.msra.mxu0 0.0
    %599 = vmatprep.subr.mxu0 0.0
    %600 = vmatpush1.msra.mxu0 0.0
    %601 = vmatprep.subr.mxu0 0.0
    %602 = vmatpush1.msra.mxu0 0.0
    %603 = vmatprep.subr.mxu0 0.0
    %604 = vmatpush1.msra.mxu0 0.0
    %605 = vmatprep.subr.mxu0 0.0
    %606 = vmatpush1.msra.mxu0 0.0
    %607 = vmatprep.subr.mxu0 0.0
    %608 = vmatpush1.msra.mxu0 0.0
    %609 = vmatprep.subr.mxu0 0.0
    %610 = vmatpush1.msra.mxu0 0.0
    %611 = vmatprep.subr.mxu0 0.0
    %612 = vmatpush1.msra.mxu0 0.0
    %613 = vmatprep.subr.mxu0 0.0
    %614 = vmatpush1.msra.mxu0 0.0
    %615 = vmatprep.subr.mxu0 0.0
    %616 = vmatpush1.msra.mxu0 0.0
    %617 = vmatprep.subr.mxu0 0.0
    %618 = vmatpush1.msra.mxu0 0.0
    %619 = vmatprep.subr.mxu0 0.0
    %620 = vmatpush1.msra.mxu0 0.0
    %621 = vmatprep.subr.mxu0 0.0
    %622 = vmatpush1.msra.mxu0 0.0
    %623 = vmatprep.subr.mxu0 0.0
    %624 = vmatpush1.msra.mxu0 0.0
    %625 = vmatprep.subr.mxu0 0.0
    %626 = vmatpush1.msra.mxu0 0.0
    %627 = vmatprep.subr.mxu0 0.0
    %628 = vmatpush1.msra.mxu0 0.0
    %629 = vmatprep.subr.mxu0 0.0
    %630 = vmatpush1.msra.mxu0 0.0
    %631 = vmatprep.subr.mxu0 0.0
    %632 = vmatpush1.msra.mxu0 0.0
    %633 = vmatprep.subr.mxu0 0.0
    %634 = vmatpush1.msra.mxu0 0.0
    %635 = vmatprep.subr.mxu0 0.0
    %636 = vmatpush1.msra.mxu0 0.0
    %637 = vmatprep.mubr.f32.mxu0 0.0
    %638 = vmatmul.mubr.f32.gmra.mrb[0].mxu0 %v184
    %v639 = vpop.f32.mrb[0].mxu0
    %v640 = vadd.f32 %v571, %v639
    %v641 = vpop.f32.mrb[0].mxu0
    %642 = vmatprep.mubr.f32.mxu0 0.0
    %643 = vmatmul.mubr.f32.gmra.mrb[0].mxu0 %v187
    %v644 = vpop.f32.mrb[0].mxu0
    %v645 = vadd.f32 %v571, %v644
    %v646 = vpop.f32.mrb[0].mxu0
    %647 = vdwg.mxu0
    %v648 = vpack.c.bf16 %v645, %v640
    %s649 = scalar_lea.vmem [#allocation7], 192
    %v650 = vld [vmem:[%s649] sm:$0xf]
    %v651 = vld [vmem:[%s649 + $0x4] sm:$0xf]
    %v652 = vld [vmem:[%s649 + $0x8] sm:$0xf]
    %v653 = vld [vmem:[%s649 + $0xc] sm:$0xf]
    %v654 = vld [vmem:[%s649 + $0x10] sm:$0xf]
    %v655 = vld [vmem:[%s649 + $0x14] sm:$0xf]
    %v656 = vld [vmem:[%s649 + $0x18] sm:$0xf]
    %v657 = vld [vmem:[%s649 + $0x1c] sm:$0xf]
    %v658 = vld [vmem:[%s649 + $0x20] sm:$0xf]
    %v659 = vld [vmem:[%s649 + $0x24] sm:$0xf]
    %v660 = vld [vmem:[%s649 + $0x28] sm:$0xf]
    %v661 = vld [vmem:[%s649 + $0x2c] sm:$0xf]
    %v662 = vld [vmem:[%s649 + $0x30] sm:$0xf]
    %v663 = vld [vmem:[%s649 + $0x34] sm:$0xf]
    %v664 = vld [vmem:[%s649 + $0x38] sm:$0xf]
    %v665 = vld [vmem:[%s649 + $0x3c] sm:$0xf]
    %s666 = scalar_lea.vmem %s3, 3
    %v667 = vld [vmem:[%s666] sm:$0x1]
    %v669 = vlaneseq
    %v670 = vshrl.u32 %v669, 7
    %v671 = vsub.s32 0, %v670
    %v672 = vrot.slane %v667, %v671
    %v690 = vunpack.c.l.b16 %v650
    %v691 = vunpack.c.l.b16 %v651
    %v692 = vunpack.c.l.b16 %v652
    %v693 = vunpack.c.l.b16 %v653
    %v694 = vunpack.c.l.b16 %v654
    %v695 = vunpack.c.l.b16 %v655
    %v696 = vunpack.c.l.b16 %v656
    %v697 = vunpack.c.l.b16 %v657
    %v698 = vunpack.c.l.b16 %v658
    %v699 = vunpack.c.l.b16 %v659
    %v700 = vunpack.c.l.b16 %v660
    %v701 = vunpack.c.l.b16 %v661
    %v702 = vunpack.c.l.b16 %v662
    %v703 = vunpack.c.l.b16 %v663
    %v704 = vunpack.c.l.b16 %v664
    %v705 = vunpack.c.l.b16 %v665
    %v706 = vpack.c.b16 %v691, %v690
    %v707 = vpack.c.b16 %v693, %v692
    %v708 = vpack.c.b16 %v695, %v694
    %v709 = vpack.c.b16 %v697, %v696
    %v710 = vpack.c.b16 %v699, %v698
    %v711 = vpack.c.b16 %v701, %v700
    %v712 = vpack.c.b16 %v703, %v702
    %v713 = vpack.c.b16 %v705, %v704
    %722 = vmatprep.subr.bf16.mxu0 0
    %723 = vmatpush1.bf16.msra.mxu0 %v706
    %724 = vmatprep.subr.bf16.mxu0 0
    %725 = vmatpush1.bf16.msra.mxu0 %v707
    %726 = vmatprep.subr.bf16.mxu0 0
    %727 = vmatpush1.bf16.msra.mxu0 %v708
    %728 = vmatprep.subr.bf16.mxu0 0
    %729 = vmatpush1.bf16.msra.mxu0 %v709
    %730 = vmatprep.subr.bf16.mxu0 0
    %731 = vmatpush1.bf16.msra.mxu0 %v710
    %732 = vmatprep.subr.bf16.mxu0 0
    %733 = vmatpush1.bf16.msra.mxu0 %v711
    %734 = vmatprep.subr.bf16.mxu0 0
    %735 = vmatpush1.bf16.msra.mxu0 %v712
    %736 = vmatprep.subr.bf16.mxu0 0
    %737 = vmatpush1.bf16.msra.mxu0 %v713
    %738 = vmatprep.subr.bf16.mxu0 0
    %739 = vmatpush1.bf16.msra.mxu0 0
    %740 = vmatprep.subr.bf16.mxu0 0
    %741 = vmatpush1.bf16.msra.mxu0 0
    %742 = vmatprep.subr.bf16.mxu0 0
    %743 = vmatpush1.bf16.msra.mxu0 0
    %744 = vmatprep.subr.bf16.mxu0 0
    %745 = vmatpush1.bf16.msra.mxu0 0
    %746 = vmatprep.subr.bf16.mxu0 0
    %747 = vmatpush1.bf16.msra.mxu0 0
    %748 = vmatprep.subr.bf16.mxu0 0
    %749 = vmatpush1.bf16.msra.mxu0 0
    %750 = vmatprep.subr.bf16.mxu0 0
    %751 = vmatpush1.bf16.msra.mxu0 0
    %752 = vmatprep.subr.bf16.mxu0 0
    %753 = vmatpush1.bf16.msra.mxu0 0
    %754 = vmatprep.mubr.bf16.mxu0 0
    %755 = vmatmul.mubr.bf16.gmra.mrb[0].mxu0 %v648
    %v756 = vpop.f32.mrb[0].mxu0
    %v757 = vadd.f32 %v672, %v756
    %v758 = vpop.f32.mrb[0].mxu0
    %v759 = vpop.f32.mrb[0].mxu0
    %v760 = vadd.f32 %v672, %v759
    %v761 = vpop.f32.mrb[0].mxu0
    %762 = vdwg.mxu0
    %v763 = vmax.f32 %v757, 0.0
    %v764 = vmax.f32 %v760, 0.0
    %v765 = vpack.c.bf16 %v764, %v763
    %s766 = scalar_lea.vmem [#allocation7], 256
    %v767 = vld [vmem:[%s766] sm:$0xf]
    %v768 = vld [vmem:[%s766 + $0x4] sm:$0xf]
    %v769 = vld [vmem:[%s766 + $0x8] sm:$0xf]
    %v770 = vld [vmem:[%s766 + $0xc] sm:$0xf]
    %v771 = vld [vmem:[%s766 + $0x10] sm:$0xf]
    %v772 = vld [vmem:[%s766 + $0x14] sm:$0xf]
    %v773 = vld [vmem:[%s766 + $0x18] sm:$0xf]
    %v774 = vld [vmem:[%s766 + $0x1c] sm:$0xf]
    %v775 = vld [vmem:[%s766 + $0x20] sm:$0xf]
    %v776 = vld [vmem:[%s766 + $0x24] sm:$0xf]
    %v777 = vld [vmem:[%s766 + $0x28] sm:$0xf]
    %v778 = vld [vmem:[%s766 + $0x2c] sm:$0xf]
    %v779 = vld [vmem:[%s766 + $0x30] sm:$0xf]
    %v780 = vld [vmem:[%s766 + $0x34] sm:$0xf]
    %v781 = vld [vmem:[%s766 + $0x38] sm:$0xf]
    %v782 = vld [vmem:[%s766 + $0x3c] sm:$0xf]
    %s783 = scalar_lea.vmem %s3, 4
    %v784 = vld [vmem:[%s783] sm:$0x1]
    %v786 = vlaneseq
    %v787 = vshrl.u32 %v786, 7
    %v788 = vsub.s32 0, %v787
    %v789 = vrot.slane %v784, %v788
    %v807 = vunpack.c.l.b16 %v767
    %v808 = vunpack.c.l.b16 %v768
    %v809 = vunpack.c.l.b16 %v769
    %v810 = vunpack.c.l.b16 %v770
    %v811 = vunpack.c.l.b16 %v771
    %v812 = vunpack.c.l.b16 %v772
    %v813 = vunpack.c.l.b16 %v773
    %v814 = vunpack.c.l.b16 %v774
    %v815 = vunpack.c.l.b16 %v775
    %v816 = vunpack.c.l.b16 %v776
    %v817 = vunpack.c.l.b16 %v777
    %v818 = vunpack.c.l.b16 %v778
    %v819 = vunpack.c.l.b16 %v779
    %v820 = vunpack.c.l.b16 %v780
    %v821 = vunpack.c.l.b16 %v781
    %v822 = vunpack.c.l.b16 %v782
    %v823 = vpack.c.b16 %v808, %v807
    %v824 = vpack.c.b16 %v810, %v809
    %v825 = vpack.c.b16 %v812, %v811
    %v826 = vpack.c.b16 %v814, %v813
    %v827 = vpack.c.b16 %v816, %v815
    %v828 = vpack.c.b16 %v818, %v817
    %v829 = vpack.c.b16 %v820, %v819
    %v830 = vpack.c.b16 %v822, %v821
    %839 = vmatprep.subr.bf16.mxu0 0
    %840 = vmatpush1.bf16.msra.mxu0 %v823
    %841 = vmatprep.subr.bf16.mxu0 0
    %842 = vmatpush1.bf16.msra.mxu0 %v824
    %843 = vmatprep.subr.bf16.mxu0 0
    %844 = vmatpush1.bf16.msra.mxu0 %v825
    %845 = vmatprep.subr.bf16.mxu0 0
    %846 = vmatpush1.bf16.msra.mxu0 %v826
    %847 = vmatprep.subr.bf16.mxu0 0
    %848 = vmatpush1.bf16.msra.mxu0 %v827
    %849 = vmatprep.subr.bf16.mxu0 0
    %850 = vmatpush1.bf16.msra.mxu0 %v828
    %851 = vmatprep.subr.bf16.mxu0 0
    %852 = vmatpush1.bf16.msra.mxu0 %v829
    %853 = vmatprep.subr.bf16.mxu0 0
    %854 = vmatpush1.bf16.msra.mxu0 %v830
    %855 = vmatprep.subr.bf16.mxu0 0
    %856 = vmatpush1.bf16.msra.mxu0 0
    %857 = vmatprep.subr.bf16.mxu0 0
    %858 = vmatpush1.bf16.msra.mxu0 0
    %859 = vmatprep.subr.bf16.mxu0 0
    %860 = vmatpush1.bf16.msra.mxu0 0
    %861 = vmatprep.subr.bf16.mxu0 0
    %862 = vmatpush1.bf16.msra.mxu0 0
    %863 = vmatprep.subr.bf16.mxu0 0
    %864 = vmatpush1.bf16.msra.mxu0 0
    %865 = vmatprep.subr.bf16.mxu0 0
    %866 = vmatpush1.bf16.msra.mxu0 0
    %867 = vmatprep.subr.bf16.mxu0 0
    %868 = vmatpush1.bf16.msra.mxu0 0
    %869 = vmatprep.subr.bf16.mxu0 0
    %870 = vmatpush1.bf16.msra.mxu0 0
    %871 = vmatprep.mubr.bf16.mxu0 0
    %872 = vmatmul.mubr.bf16.gmra.mrb[0].mxu0 %v765
    %v873 = vpop.f32.mrb[0].mxu0
    %v874 = vadd.f32 %v789, %v873
    %v875 = vpop.f32.mrb[0].mxu0
    %v876 = vpop.f32.mrb[0].mxu0
    %v877 = vadd.f32 %v789, %v876
    %v878 = vpop.f32.mrb[0].mxu0
    %879 = vdwg.mxu0
    %v880 = vpack.c.bf16 %v877, %v874
    %v882 = vunpack.c.l.b16 %v880
    %v883 = vunpack.c.h.b16 %v880
    %v884 = vpack.c.b16 %v882, %v882
    %v885 = vpack.c.b16 %v883, %v883
    %888 = vst [vmem:[#allocation8] sm:$0xf] %v884
    %889 = vst [vmem:[#allocation8 + $0x4] sm:$0xf] %v885
    // Predicated region
    $region30: #{gnn_forward.1} parent=1 // pred_check
      _
    $region31: #{gnn_forward.1} parent=1 // pred_check_branch
      %891 = sbr.rel (0) target = $region33
    $region32: #{gnn_forward.1} parent=1 // pred_region
      %s893 = ssub.s32 128, 128
      %894 = vsyncadd [#allocation4], %s893
      %s895 = sshll.u32 [#allocation8], 4
      %s896 = int_to_ptr.vmem [resolvable:$true] %s895
      %901 = dma.vmem_to_hbm [thread:$0]  %s896, 128, %s4, [#allocation4], 64, 64, 4
    $region33: #{gnn_forward.1} parent=1 // pred_fallthru
      _
    // Predicated region
    $region34: #{gnn_forward.1} parent=1 // pred_check
      _
    $region35: #{gnn_forward.1} parent=1 // pred_check_branch
      %903 = sbr.rel (0) target = $region37
    $region36: #{gnn_forward.1} parent=1 // pred_region
      %904 = dma.done [#allocation4], 128
    $region37: #{gnn_forward.1} parent=1 // pred_fallthru
      _
    %905 = vsyncpa [#allocation3], 1
    %906 = vsyncpa [#allocation6], 1
    %907 = vsyncpa [#allocation4], 1

</llo_original>
